<compile_context>
chip_gen: v6e
topology: v6e:2x2x1
jax: 0.10.0
libtpu: 0.0.40
codegen_flags: <defaults>
</compile_context>

<pallas_src>
import functools

import numpy as np
import jax
import jax.numpy as jnp
from jax import lax
from jax.experimental import pallas as pl
from jax.experimental.pallas import tpu as pltpu

# ----- fixed 5-tap Gaussian (deterministic) and Charbonnier eps -----
_K1D = np.array([0.05, 0.25, 0.4, 0.25, 0.05], dtype=np.float64)
_K2D = np.outer(_K1D, _K1D).astype(np.float32)    # for the conv reference
KW = 5
PAD = KW // 2
EPS = 1e-3
_EPS2 = EPS * EPS

# Budgets (perf review items 5/6): per-step f32 input tile ~1 MiB so the
# in-kernel f32 working set + double-buffered inputs stay far inside v7x's
# 64 MiB VMEM; v5e/v6e (128 MiB) may raise both.
_STEP_F32_BUDGET = 1 * 1024 * 1024
_MAX_PACKED_LANES = 512
_MAX_GROUPS_PER_STEP = 8
_VMEM_LIMIT_BYTES = 32 * 1024 * 1024


# ---------------------------------------------------------------------------
# Band matrices: lap(X) = X - M_H @ X @ M_W^T  (per plane)
# ---------------------------------------------------------------------------
def _band_gauss(n):
    """(n, n) matrix of the 5-tap Gaussian with replicate padding folded in."""
    g = np.zeros((n, n), dtype=np.float64)
    for i in range(n):
        for t in range(KW):
            j = min(max(i + t - PAD, 0), n - 1)
            g[i, j] += _K1D[t]
    return g


def _lap_matrices(H, W, L):
    """conv_gauss(X) = G_H X G_W^T; mask4 is the separable diagonal scaling
    D_H (*) D_W (2*even on each axis -> x4 on even/even), hence

        conv_gauss(mask4(conv_gauss(X))) = (G_H D_H G_H) X (G_W D_W G_W)^T.

    M_W^T is replicated block-diagonally L times so L planes can sit
    side-by-side along the lane axis (review item 7)."""
    def m(n):
        g = _band_gauss(n)
        d = np.diag((np.arange(n) % 2 == 0).astype(np.float64) * 2.0)
        return g @ d @ g

    mh = m(H)
    mwt_packed = np.kron(np.eye(L, dtype=np.float64), m(W).T)
    return (jnp.asarray(mh.astype(np.float32)),
            jnp.asarray(mwt_packed.astype(np.float32)))


def _choose_packing(P, H, W):
    """(L, G, gb): L planes lane-packed per group, G = P // L groups,
    gb groups per grid step (sized from the f32 working set)."""
    max_tile = max(_STEP_F32_BUDGET, H * W * 4)   # always allow one plane
    L = 1
    for d in range(1, P + 1):
        if (P % d == 0 and d * W <= max(_MAX_PACKED_LANES, W)
                and H * d * W * 4 <= max_tile):
            L = d
    G = P // L
    cap = min(_MAX_GROUPS_PER_STEP,
              max(1, _STEP_F32_BUDGET // (H * L * W * 4)))
    gb = 1
    for d in range(1, G + 1):
        if G % d == 0 and d <= cap:
            gb = d
    return L, G, gb


# ---------------------------------------------------------------------------
# Edge / Charbonnier loss kernel
# ---------------------------------------------------------------------------
def _edge_loss_kernel(x_ref, y_ref, mh_ref, mwt_ref, out_ref, *, gb):
    """One grid step = gb groups of L lane-packed planes.

    Per group (linearity, item 1):   d = x - y  (f32)
                                     lap = d - M_H @ (d @ M_W^T)   (2 MXU dots)
                                     partial += sum(sqrt(lap^2 + eps^2))
    The per-step partial goes to its own output block so the grid axis can be
    "parallel" (megacore, item 4); the wrapper tree-sums the partials."""
    mh = mh_ref[...]
    mwt = mwt_ref[...]
    acc = jnp.float32(0.0)
    for q in range(gb):                                   # static unroll, <= 8
        d = x_ref[q].astype(jnp.float32) - y_ref[q].astype(jnp.float32)
        t = jnp.dot(d, mwt, preferred_element_type=jnp.float32)    # horizontal
        g2 = jnp.dot(mh, t, preferred_element_type=jnp.float32)    # vertical
        lap = d - g2
        acc = acc + jnp.sum(jnp.sqrt(lap * lap + _EPS2))
    # replicate across one lane row -> unmasked store; wrapper reads [:, 0, 0]
    out_ref[...] = jnp.broadcast_to(acc, (1, 128))


def edge_loss(x_nchw, y_nchw):
    """EdgeLoss: CharbonnierLoss(laplacian(x), laplacian(y)). Returns f32."""
    B, C, H, W = x_nchw.shape
    P = B * C
    L, G, gb = _choose_packing(P, H, W)
    LW = L * W
    steps = G // gb
    # TODO(synk): planes whose f32 footprint exceeds the per-step budget need
    # H-halo tiling (row-blocked M_H); not required at these sizes.

    def regroup(a):   # (B,C,H,W) -> (G, H, L*W): L planes side-by-side on lanes
        return a.reshape(G, L, H, W).transpose(0, 2, 1, 3).reshape(G, H, LW)

    xg = regroup(x_nchw)
    yg = regroup(y_nchw)
    mh, mwt = _lap_matrices(H, W, L)

    kernel = functools.partial(_edge_loss_kernel, gb=gb)
    partials = pl.pallas_call(
        kernel,
        out_shape=jax.ShapeDtypeStruct((steps, 1, 128), jnp.float32),
        grid=(steps,),
        in_specs=[
            pl.BlockSpec((gb, H, LW), lambda i: (i, 0, 0)),
            pl.BlockSpec((gb, H, LW), lambda i: (i, 0, 0)),
            pl.BlockSpec((H, H), lambda i: (0, 0)),      # resident across grid
            pl.BlockSpec((LW, LW), lambda i: (0, 0)),    # resident across grid
        ],
        out_specs=pl.BlockSpec((None, 1, 128), lambda i: (i, 0, 0)),
        compiler_params=pltpu.CompilerParams(
            dimension_semantics=("parallel",),           # megacore on v7x
            vmem_limit_bytes=_VMEM_LIMIT_BYTES),
    )(xg, yg, mh, mwt)
    return jnp.sum(partials[:, 0, 0]) / float(P * H * W)


# ---------------------------------------------------------------------------
# perceptual_loss distance head: sqrt(sum((fx - fy)^2)) / (Hf * Wf)
# ---------------------------------------------------------------------------
def _sqdiff_partial_kernel(x_ref, y_ref, out_ref):
    d = x_ref[...].astype(jnp.float32) - y_ref[...].astype(jnp.float32)
    out_ref[...] = jnp.broadcast_to(jnp.sum(d * d), (1, 128))


def perceptual_feature_distance(feat_x, feat_y):
    B, C, Hf, Wf = feat_x.shape
    P = B * C
    cap = max(1, _STEP_F32_BUDGET // (Hf * Wf * 4))
    pb = 1
    for d in range(1, P + 1):
        if P % d == 0 and d <= cap:
            pb = d
    steps = P // pb
    xp = feat_x.reshape(P, Hf, Wf)
    yp = feat_y.reshape(P, Hf, Wf)
    partials = pl.pallas_call(
        _sqdiff_partial_kernel,
        out_shape=jax.ShapeDtypeStruct((steps, 1, 128), jnp.float32),
        grid=(steps,),
        in_specs=[pl.BlockSpec((pb, Hf, Wf), lambda i: (i, 0, 0)),
                  pl.BlockSpec((pb, Hf, Wf), lambda i: (i, 0, 0))],
        out_specs=pl.BlockSpec((None, 1, 128), lambda i: (i, 0, 0)),
        compiler_params=pltpu.CompilerParams(
            dimension_semantics=("parallel",),
            vmem_limit_bytes=_VMEM_LIMIT_BYTES),
    )(xp, yp)
    return jnp.sqrt(jnp.sum(partials[:, 0, 0])) / float(Hf * Wf)


# ---------------------------------------------------------------------------
# Pure-JAX references (correctness sanity checks)
# ---------------------------------------------------------------------------
def _ref_conv_gauss(planes):
    padded = jnp.pad(planes, ((0, 0), (PAD, PAD), (PAD, PAD)), mode="edge")
    k = jnp.asarray(_K2D)[None, None]  # (1,1,5,5)
    out = lax.conv_general_dilated(
        padded[:, None], k, window_strides=(1, 1), padding="VALID",
        dimension_numbers=("NCHW", "OIHW", "NCHW"),
        precision=lax.Precision.HIGHEST)
    return out[:, 0]


def _ref_edge_loss(x_nchw, y_nchw):
    B, C, H, W = x_nchw.shape

    def lap(planes):
        g1 = _ref_conv_gauss(planes)
        hm = (jnp.arange(H) % 2 == 0).astype(planes.dtype)
        wm = (jnp.arange(W) % 2 == 0).astype(planes.dtype)
        nf = g1 * (hm[:, None] * wm[None, :])[None] * 4.0
        return planes - _ref_conv_gauss(nf)

    xp = x_nchw.reshape(B * C, H, W).astype(jnp.float32)
    yp = y_nchw.reshape(B * C, H, W).astype(jnp.float32)
    d = lap(xp) - lap(yp)
    return jnp.mean(jnp.sqrt(d * d + _EPS2))


def _ref_perceptual_distance(feat_x, feat_y):
    d = feat_x.astype(jnp.float32) - feat_y.astype(jnp.float32)
    return jnp.sqrt(jnp.sum(d * d)) / float(feat_x.shape[2] * feat_x.shape[3])


if __name__ == "__main__":
    key = jax.random.PRNGKey(0)
    kx, ky, kfx, kfy = jax.random.split(key, 4)

    # Edge / Charbonnier loss from losses.py.
    B, C, H, W = 2, 3, 16, 16
    x = jax.random.uniform(kx, (B, C, H, W), dtype=jnp.float32)
    y = jax.random.uniform(ky, (B, C, H, W), dtype=jnp.float32)
    loss = jax.block_until_ready(edge_loss(x, y))
    ref = jax.block_until_ready(_ref_edge_loss(x, y))
    np.testing.assert_allclose(np.asarray(loss), np.asarray(ref),
                               rtol=5e-3, atol=1e-4)

    # perceptual_loss distance head on stand-in feature maps (the DenseNet-161
    # extractor itself is untranslatable without pretrained weights).
    Bf, Cf, Hf, Wf = 2, 4, 16, 16
    fx = jax.random.normal(kfx, (Bf, Cf, Hf, Wf), dtype=jnp.float32)
    fy = jax.random.normal(kfy, (Bf, Cf, Hf, Wf), dtype=jnp.float32)
    ploss = jax.block_until_ready(perceptual_feature_distance(fx, fy))
    pref = jax.block_until_ready(_ref_perceptual_distance(fx, fy))
    np.testing.assert_allclose(np.asarray(ploss), np.asarray(pref),
                               rtol=1e-4, atol=1e-6)

    print("KERNEL_OK")
</pallas_src>

<mosaic_0001>
module attributes {stable_mosaic.version = 11 : i64} {
  func.func @_edge_loss_kernel(%arg0: i32, %arg1: memref<1x16x96xf32, #tpu.memory_space<vmem>>, %arg2: memref<1x16x96xf32, #tpu.memory_space<vmem>>, %arg3: memref<16x16xf32, #tpu.memory_space<vmem>>, %arg4: memref<96x96xf32, #tpu.memory_space<vmem>>, %arg5: memref<1x1x128xf32, #tpu.memory_space<vmem>>) attributes {dimension_semantics = [#tpu.dimension_semantics<parallel>], iteration_bounds = array<i64: 1>, scalar_prefetch = 0 : i64, scratch_operands = 0 : i64, tpu.core_type = #tpu.core_type<tc>, window_params = [{transform_indices = @transform_0, window_bounds = array<i64: 1, 16, 96>}, {transform_indices = @transform_1, window_bounds = array<i64: 1, 16, 96>}, {pipeline_mode = #tpu.pipeline_mode<synchronous>, transform_indices = @transform_2, window_bounds = array<i64: 16, 16>}, {pipeline_mode = #tpu.pipeline_mode<synchronous>, transform_indices = @transform_3, window_bounds = array<i64: 96, 96>}, {transform_indices = @transform_4, window_bounds = array<i64: 1, 1, 128>}]} {
    %c0 = arith.constant 0 : index
    %c0_0 = arith.constant 0 : index
    %0 = vector.load %arg3[%c0, %c0_0] : memref<16x16xf32, #tpu.memory_space<vmem>>, vector<16x16xf32>
    %c0_1 = arith.constant 0 : index
    %c0_2 = arith.constant 0 : index
    %1 = vector.load %arg4[%c0_1, %c0_2] : memref<96x96xf32, #tpu.memory_space<vmem>>, vector<96x96xf32>
    %c0_3 = arith.constant 0 : index
    %c0_4 = arith.constant 0 : index
    %c0_5 = arith.constant 0 : index
    %2 = vector.load %arg1[%c0_3, %c0_4, %c0_5] : memref<1x16x96xf32, #tpu.memory_space<vmem>>, vector<1x16x96xf32>
    %3 = vector.shape_cast %2 : vector<1x16x96xf32> to vector<16x96xf32>
    %c0_6 = arith.constant 0 : index
    %c0_7 = arith.constant 0 : index
    %c0_8 = arith.constant 0 : index
    %4 = vector.load %arg2[%c0_6, %c0_7, %c0_8] : memref<1x16x96xf32, #tpu.memory_space<vmem>>, vector<1x16x96xf32>
    %5 = vector.shape_cast %4 : vector<1x16x96xf32> to vector<16x96xf32>
    %6 = arith.subf %3, %5 : vector<16x96xf32>
    %cst = arith.constant dense<0.000000e+00> : vector<16x96xf32>
    %7 = tpu.matmul %6, %1, %cst {dimension_numbers = #tpu.dot_dimension_numbers<[1], [0], [0], [1], [0, 0, 1, 1], [], []>} : vector<16x96xf32>, vector<96x96xf32>, vector<16x96xf32> -> vector<16x96xf32>
    %cst_9 = arith.constant dense<0.000000e+00> : vector<16x96xf32>
    %8 = tpu.matmul %0, %7, %cst_9 {dimension_numbers = #tpu.dot_dimension_numbers<[1], [0], [0], [1], [0, 0, 1, 1], [], []>} : vector<16x16xf32>, vector<16x96xf32>, vector<16x96xf32> -> vector<16x96xf32>
    %9 = arith.subf %6, %8 : vector<16x96xf32>
    %10 = arith.mulf %9, %9 : vector<16x96xf32>
    %cst_10 = arith.constant 9.99999997E-7 : f32
    %11 = vector.broadcast %cst_10 : f32 to vector<16x96xf32>
    %12 = arith.addf %10, %11 : vector<16x96xf32>
    %13 = math.sqrt %12 : vector<16x96xf32>
    %14 = vector.shape_cast %13 : vector<16x96xf32> to vector<1x16x96xf32>
    %cst_11 = arith.constant dense<0.000000e+00> : vector<1xf32>
    %15 = vector.multi_reduction <add>, %14, %cst_11 [1, 2] : vector<1x16x96xf32> to vector<1xf32>
    %16 = vector.shape_cast %15 : vector<1xf32> to vector<1x1x1xf32>
    %17 = vector.extract %16[0, 0, 0] : f32 from vector<1x1x1xf32>
    %cst_12 = arith.constant 0.000000e+00 : f32
    %18 = arith.addf %cst_12, %17 : f32
    %19 = vector.broadcast %18 : f32 to vector<1x128xf32>
    %c0_13 = arith.constant 0 : index
    %c0_14 = arith.constant 0 : index
    %c0_15 = arith.constant 0 : index
    %20 = vector.load %arg5[%c0_13, %c0_14, %c0_15] : memref<1x1x128xf32, #tpu.memory_space<vmem>>, vector<1x1x128xf32>
    %21 = vector.shape_cast %20 : vector<1x1x128xf32> to vector<1x128xf32>
    %22 = vector.shape_cast %19 : vector<1x128xf32> to vector<1x1x128xf32>
    tpu.vector_store %arg5[%c0_13, %c0_14, %c0_15], %22 {strides = array<i32>} : memref<1x1x128xf32, #tpu.memory_space<vmem>>, vector<1x1x128xf32>,
    return
  }
  func.func @transform_0(%arg0: i32) -> (i32, i32, i32) {
    %c0_i32 = arith.constant 0 : i32
    %c0_i32_0 = arith.constant 0 : i32
    %c0_i32_1 = arith.constant 0 : i32
    return %arg0, %c0_i32, %c0_i32_0 : i32, i32, i32
  }
  func.func @transform_1(%arg0: i32) -> (i32, i32, i32) {
    %c0_i32 = arith.constant 0 : i32
    %c0_i32_0 = arith.constant 0 : i32
    %c0_i32_1 = arith.constant 0 : i32
    return %arg0, %c0_i32, %c0_i32_0 : i32, i32, i32
  }
  func.func @transform_2(%arg0: i32) -> (i32, i32) {
    %c0_i32 = arith.constant 0 : i32
    %c0_i32_0 = arith.constant 0 : i32
    %c0_i32_1 = arith.constant 0 : i32
    return %c0_i32, %c0_i32_0 : i32, i32
  }
  func.func @transform_3(%arg0: i32) -> (i32, i32) {
    %c0_i32 = arith.constant 0 : i32
    %c0_i32_0 = arith.constant 0 : i32
    %c0_i32_1 = arith.constant 0 : i32
    return %c0_i32, %c0_i32_0 : i32, i32
  }
  func.func @transform_4(%arg0: i32) -> (i32, i32, i32) {
    %c0_i32 = arith.constant 0 : i32
    %c0_i32_0 = arith.constant 0 : i32
    %c0_i32_1 = arith.constant 0 : i32
    return %arg0, %c0_i32, %c0_i32_0 : i32, i32, i32
  }
}

</mosaic_0001>

<llo_original>
// kernel: tpu_custom_call.1
$region0: #{tpu_custom_call.1}
  #allocation0 [shape = 'u32[]', space=smem, size = 0x4, offset = 0x4, fixed_abs, tag = 'smem constant byte address 0x4 - core index']
  #allocation1 [shape = 'u32[144,128]{1,0:T(1,128)}', space=vmem, size = 0x12000, scoped, tag = 'internal scratch']
  %s0 = inlined_call_operand.hbm [shape: f32[1,16,96], index: 0, kind: input, shape index: {}]
  %s1 = inlined_call_operand.hbm [shape: f32[1,16,96], index: 1, kind: input, shape index: {}]
  %s2 = inlined_call_operand.hbm [shape: f32[16,16], index: 2, kind: input, shape index: {}]
  %s3 = inlined_call_operand.hbm [shape: f32[96,96], index: 3, kind: input, shape index: {}]
  %s4 = inlined_call_operand.hbm [shape: f32[1,1,128], index: 4, kind: output, shape index: {}]
  %s5 = sld [smem:[#allocation0]]
  $region42: #{tpu_custom_call.1} parent=0
    _
  %s7 = ssub.s32 1, %s5
  %s8 = scalar_select 0, %s7, %s5
  $region1: #{tpu_custom_call.1} parent=0
    #allocation2 [shape = 'u8[8192]{0}', space=vmem, size = 0x2000, scoped, tag = 'input window, operand 0, single buffered']
    #allocation3 [shape = 's32[1]{0}', space=sflag, size = 0x4, scoped, tag = 'scoped memory for tpu_custom_call.1']
    #allocation4 [shape = 's32[1]{0}', space=sflag, size = 0x4, scoped, tag = 'scoped memory for tpu_custom_call.1']
    #allocation5 [shape = 'u8[8192]{0}', space=vmem, size = 0x2000, scoped, tag = 'input window, operand 1, single buffered']
    #allocation6 [shape = 's32[1]{0}', space=sflag, size = 0x4, scoped, tag = 'scoped memory for tpu_custom_call.1']
    #allocation7 [shape = 'u8[8192]{0}', space=vmem, size = 0x2000, scoped, tag = 'input window, operand 2, single buffered']
    #allocation8 [shape = 'u8[49152]{0}', space=vmem, size = 0xc000, scoped, tag = 'input window, operand 3, single buffered']
    #allocation9 [shape = 's32[1]{0}', space=sflag, size = 0x4, scoped, tag = 'scoped memory for tpu_custom_call.1']
    #allocation10 [shape = 'u8[512]{0}', space=vmem, size = 0x400, scoped, tag = 'output window, operand 0, single buffered']
    %9 = vsyncpa [#allocation3], 0
    %10 = vsyncpa [#allocation6], 0
    %11 = vsyncpa [#allocation9], 0
    %12 = vsyncpa [#allocation4], 0
    // Predicated region
    $region2: #{tpu_custom_call.1} parent=1 // pred_check
      _
    $region3: #{tpu_custom_call.1} parent=1 // pred_check_branch
      %14 = sbr.rel (0) target = $region5
    $region4: #{tpu_custom_call.1} parent=1 // pred_region
      %s16 = ssub.s32 256, 256
      %17 = vsyncadd [#allocation3], %s16
      %s18 = sshll.u32 [#allocation2], 4
      %s19 = int_to_ptr.vmem [resolvable:$true] %s18
      %24 = dma.hbm_to_vmem [thread:$0]  %s0, 256, %s19, [#allocation3], 128, 128, 8
    $region5: #{tpu_custom_call.1} parent=1 // pred_fallthru
      _
    // Predicated region
    $region6: #{tpu_custom_call.1} parent=1 // pred_check
      _
    $region7: #{tpu_custom_call.1} parent=1 // pred_check_branch
      %26 = sbr.rel (0) target = $region9
    $region8: #{tpu_custom_call.1} parent=1 // pred_region
      %s28 = ssub.s32 256, 256
      %29 = vsyncadd [#allocation6], %s28
      %s30 = sshll.u32 [#allocation5], 4
      %s31 = int_to_ptr.vmem [resolvable:$true] %s30
      %36 = dma.hbm_to_vmem [thread:$0]  %s1, 256, %s31, [#allocation6], 128, 128, 8
    $region9: #{tpu_custom_call.1} parent=1 // pred_fallthru
      _
    // Predicated region
    $region10: #{tpu_custom_call.1} parent=1 // pred_check
      _
    $region11: #{tpu_custom_call.1} parent=1 // pred_check_branch
      %38 = sbr.rel (0) target = $region13
    $region12: #{tpu_custom_call.1} parent=1 // pred_region
      %s40 = ssub.s32 256, 256
      %41 = vsyncadd [#allocation6], %s40
      %s42 = sshll.u32 [#allocation7], 4
      %s43 = int_to_ptr.vmem [resolvable:$true] %s42
      %48 = dma.hbm_to_vmem [thread:$0]  %s2, 256, %s43, [#allocation6], 128, 128, 8
    $region13: #{tpu_custom_call.1} parent=1 // pred_fallthru
      _
    // Predicated region
    $region14: #{tpu_custom_call.1} parent=1 // pred_check
      _
    $region15: #{tpu_custom_call.1} parent=1 // pred_check_branch
      %50 = sbr.rel (0) target = $region17
    $region16: #{tpu_custom_call.1} parent=1 // pred_region
      %s52 = ssub.s32 1536, 1536
      %53 = vsyncadd [#allocation9], %s52
      %s54 = sshll.u32 [#allocation8], 4
      %s55 = int_to_ptr.vmem [resolvable:$true] %s54
      %60 = dma.hbm_to_vmem [thread:$0]  %s3, 1536, %s55, [#allocation9], 128, 128, 8
    $region17: #{tpu_custom_call.1} parent=1 // pred_fallthru
      _
    // Predicated region
    $region18: #{tpu_custom_call.1} parent=1 // pred_check
      _
    $region19: #{tpu_custom_call.1} parent=1 // pred_check_branch
      %62 = sbr.rel (0) target = $region21
    $region20: #{tpu_custom_call.1} parent=1 // pred_region
      %63 = dma.done [#allocation3], 256
    $region21: #{tpu_custom_call.1} parent=1 // pred_fallthru
      _
    // Predicated region
    $region22: #{tpu_custom_call.1} parent=1 // pred_check
      _
    $region23: #{tpu_custom_call.1} parent=1 // pred_check_branch
      %65 = sbr.rel (0) target = $region25
    $region24: #{tpu_custom_call.1} parent=1 // pred_region
      %66 = dma.done [#allocation6], 256
    $region25: #{tpu_custom_call.1} parent=1 // pred_fallthru
      _
    // Predicated region
    $region26: #{tpu_custom_call.1} parent=1 // pred_check
      _
    $region27: #{tpu_custom_call.1} parent=1 // pred_check_branch
      %68 = sbr.rel (0) target = $region29
    $region28: #{tpu_custom_call.1} parent=1 // pred_region
      %69 = dma.done [#allocation6], 256
    $region29: #{tpu_custom_call.1} parent=1 // pred_fallthru
      _
    // Predicated region
    $region30: #{tpu_custom_call.1} parent=1 // pred_check
      _
    $region31: #{tpu_custom_call.1} parent=1 // pred_check_branch
      %71 = sbr.rel (0) target = $region33
    $region32: #{tpu_custom_call.1} parent=1 // pred_region
      %72 = dma.done [#allocation9], 1536
    $region33: #{tpu_custom_call.1} parent=1 // pred_fallthru
      _
    %v73 = vld [vmem:[#allocation7] sm:$0xff]
    %v74 = vld [vmem:[#allocation7 + $0x8] sm:$0xff]
    %v75 = vld [vmem:[#allocation8] sm:$0xff]
    %v76 = vld [vmem:[#allocation8 + $0x8] sm:$0xff]
    %v77 = vld [vmem:[#allocation8 + $0x10] sm:$0xff]
    %v78 = vld [vmem:[#allocation8 + $0x18] sm:$0xff]
    %v79 = vld [vmem:[#allocation8 + $0x20] sm:$0xff]
    %v80 = vld [vmem:[#allocation8 + $0x28] sm:$0xff]
    %v81 = vld [vmem:[#allocation8 + $0x30] sm:$0xff]
    %v82 = vld [vmem:[#allocation8 + $0x38] sm:$0xff]
    %v83 = vld [vmem:[#allocation8 + $0x40] sm:$0xff]
    %v84 = vld [vmem:[#allocation8 + $0x48] sm:$0xff]
    %v85 = vld [vmem:[#allocation8 + $0x50] sm:$0xff]
    %v86 = vld [vmem:[#allocation8 + $0x58] sm:$0xff]
    %v87 = vld [vmem:[#allocation2] sm:$0xff]
    %v88 = vld [vmem:[#allocation2 + $0x8] sm:$0xff]
    %v89 = vld [vmem:[#allocation5] sm:$0xff]
    %v90 = vld [vmem:[#allocation5 + $0x8] sm:$0xff]
    %v91 = vsub.f32 %v87, %v89
    %v92 = vsub.f32 %v88, %v90
    %vm93 = vcmask 785408
    %v95 = vsel %vm93, %v91, 0
    %v98 = vsel %vm93, %v92, 0
    %100 = vmatprep.subr.mxu0 0.0
    %101 = vmatpush1.msra.mxu0 0.0
    %102 = vmatprep.subr.mxu0 0.0
    %103 = vmatpush1.msra.mxu0 0.0
    %104 = vmatprep.subr.mxu0 0.0
    %105 = vmatpush1.msra.mxu0 0.0
    %106 = vmatprep.subr.mxu0 0.0
    %107 = vmatpush1.msra.mxu0 0.0
    %108 = vmatprep.subr.mxu0 0.0
    %109 = vmatpush1.msra.mxu0 %v86
    %110 = vmatprep.subr.mxu0 0.0
    %111 = vmatpush1.msra.mxu0 %v85
    %112 = vmatprep.subr.mxu0 0.0
    %113 = vmatpush1.msra.mxu0 %v84
    %114 = vmatprep.subr.mxu0 0.0
    %115 = vmatpush1.msra.mxu0 %v83
    %116 = vmatprep.subr.mxu0 0.0
    %117 = vmatpush1.msra.mxu0 %v82
    %118 = vmatprep.subr.mxu0 0.0
    %119 = vmatpush1.msra.mxu0 %v81
    %120 = vmatprep.subr.mxu0 0.0
    %121 = vmatpush1.msra.mxu0 %v80
    %122 = vmatprep.subr.mxu0 0.0
    %123 = vmatpush1.msra.mxu0 %v79
    %124 = vmatprep.subr.mxu0 0.0
    %125 = vmatpush1.msra.mxu0 %v78
    %126 = vmatprep.subr.mxu0 0.0
    %127 = vmatpush1.msra.mxu0 %v77
    %128 = vmatprep.subr.mxu0 0.0
    %129 = vmatpush1.msra.mxu0 %v76
    %130 = vmatprep.subr.mxu0 0.0
    %131 = vmatpush1.msra.mxu0 %v75
    %132 = vmatprep.subr.mxu0 0.0
    %133 = vmatpush2.msra.mxu0 0.0
    %134 = vmatprep.subr.mxu0 0.0
    %135 = vmatpush2.msra.mxu0 0.0
    %136 = vmatprep.subr.mxu0 0.0
    %137 = vmatpush2.msra.mxu0 0.0
    %138 = vmatprep.subr.mxu0 0.0
    %139 = vmatpush2.msra.mxu0 0.0
    %140 = vmatprep.subr.mxu0 0.0
    %141 = vmatpush2.msra.mxu0 0.0
    %142 = vmatprep.subr.mxu0 0.0
    %143 = vmatpush2.msra.mxu0 0.0
    %144 = vmatprep.subr.mxu0 0.0
    %145 = vmatpush2.msra.mxu0 0.0
    %146 = vmatprep.subr.mxu0 0.0
    %147 = vmatpush2.msra.mxu0 0.0
    %148 = vmatprep.subr.mxu0 0.0
    %149 = vmatpush2.msra.mxu0 0.0
    %150 = vmatprep.subr.mxu0 0.0
    %151 = vmatpush2.msra.mxu0 0.0
    %152 = vmatprep.subr.mxu0 0.0
    %153 = vmatpush2.msra.mxu0 0.0
    %154 = vmatprep.subr.mxu0 0.0
    %155 = vmatpush2.msra.mxu0 0.0
    %156 = vmatprep.subr.mxu0 0.0
    %157 = vmatpush2.msra.mxu0 0.0
    %158 = vmatprep.subr.mxu0 0.0
    %159 = vmatpush2.msra.mxu0 0.0
    %160 = vmatprep.subr.mxu0 0.0
    %161 = vmatpush2.msra.mxu0 0.0
    %162 = vmatprep.subr.mxu0 0.0
    %163 = vmatpush2.msra.mxu0 0.0
    %164 = vmatprep.mubr.f32.mxu0 0.0
    %165 = vmatmul.mubr.f32.gmra.mxu0 %v95
    %v166 = vpop.f32.mrf.mxu0
    %v167 = vadd.f32 0.0, %v166
    %v168 = vpop.f32.mrf.mxu0
    %169 = vmatprep.mubr.f32.mxu0 0.0
    %170 = vmatmul.mubr.f32.gmra.mxu0 %v98
    %v171 = vpop.f32.mrf.mxu0
    %v172 = vadd.f32 0.0, %v171
    %v173 = vpop.f32.mrf.mxu0
    %174 = vdwg.mxu0
    %vm175 = vcmask 130048
    %v177 = vsel %vm175, %v73, 0
    %v180 = vsel %vm175, %v74, 0
    %182 = vmatprep.subr.mxu0 0.0
    %183 = vmatpush1.msra.mxu0 0.0
    %184 = vmatprep.subr.mxu0 0.0
    %185 = vmatpush1.msra.mxu0 0.0
    %186 = vmatprep.subr.mxu0 0.0
    %187 = vmatpush1.msra.mxu0 0.0
    %188 = vmatprep.subr.mxu0 0.0
    %189 = vmatpush1.msra.mxu0 0.0
    %190 = vmatprep.subr.mxu0 0.0
    %191 = vmatpush1.msra.mxu0 0.0
    %192 = vmatprep.subr.mxu0 0.0
    %193 = vmatpush1.msra.mxu0 0.0
    %194 = vmatprep.subr.mxu0 0.0
    %195 = vmatpush1.msra.mxu0 0.0
    %196 = vmatprep.subr.mxu0 0.0
    %197 = vmatpush1.msra.mxu0 0.0
    %198 = vmatprep.subr.mxu0 0.0
    %199 = vmatpush1.msra.mxu0 0.0
    %200 = vmatprep.subr.mxu0 0.0
    %201 = vmatpush1.msra.mxu0 0.0
    %202 = vmatprep.subr.mxu0 0.0
    %203 = vmatpush1.msra.mxu0 0.0
    %204 = vmatprep.subr.mxu0 0.0
    %205 = vmatpush1.msra.mxu0 0.0
    %206 = vmatprep.subr.mxu0 0.0
    %207 = vmatpush1.msra.mxu0 0.0
    %208 = vmatprep.subr.mxu0 0.0
    %209 = vmatpush1.msra.mxu0 0.0
    %210 = vmatprep.subr.mxu0 0.0
    %211 = vmatpush1.msra.mxu0 %v172
    %212 = vmatprep.subr.mxu0 0.0
    %213 = vmatpush1.msra.mxu0 %v167
    %214 = vmatprep.subr.mxu0 0.0
    %215 = vmatpush2.msra.mxu0 0.0
    %216 = vmatprep.subr.mxu0 0.0
    %217 = vmatpush2.msra.mxu0 0.0
    %218 = vmatprep.subr.mxu0 0.0
    %219 = vmatpush2.msra.mxu0 0.0
    %220 = vmatprep.subr.mxu0 0.0
    %221 = vmatpush2.msra.mxu0 0.0
    %222 = vmatprep.subr.mxu0 0.0
    %223 = vmatpush2.msra.mxu0 0.0
    %224 = vmatprep.subr.mxu0 0.0
    %225 = vmatpush2.msra.mxu0 0.0
    %226 = vmatprep.subr.mxu0 0.0
    %227 = vmatpush2.msra.mxu0 0.0
    %228 = vmatprep.subr.mxu0 0.0
    %229 = vmatpush2.msra.mxu0 0.0
    %230 = vmatprep.subr.mxu0 0.0
    %231 = vmatpush2.msra.mxu0 0.0
    %232 = vmatprep.subr.mxu0 0.0
    %233 = vmatpush2.msra.mxu0 0.0
    %234 = vmatprep.subr.mxu0 0.0
    %235 = vmatpush2.msra.mxu0 0.0
    %236 = vmatprep.subr.mxu0 0.0
    %237 = vmatpush2.msra.mxu0 0.0
    %238 = vmatprep.subr.mxu0 0.0
    %239 = vmatpush2.msra.mxu0 0.0
    %240 = vmatprep.subr.mxu0 0.0
    %241 = vmatpush2.msra.mxu0 0.0
    %242 = vmatprep.subr.mxu0 0.0
    %243 = vmatpush2.msra.mxu0 0.0
    %244 = vmatprep.subr.mxu0 0.0
    %245 = vmatpush2.msra.mxu0 0.0
    %246 = vmatprep.mubr.f32.mxu0 0.0
    %247 = vmatmul.mubr.f32.gmra.mxu0 %v177
    %v248 = vpop.f32.mrf.mxu0
    %v249 = vadd.f32 0.0, %v248
    %v250 = vpop.f32.mrf.mxu0
    %251 = vmatprep.mubr.f32.mxu0 0.0
    %252 = vmatmul.mubr.f32.gmra.mxu0 %v180
    %v253 = vpop.f32.mrf.mxu0
    %v254 = vadd.f32 0.0, %v253
    %v255 = vpop.f32.mrf.mxu0
    %256 = vdwg.mxu0
    %v257 = vsub.f32 %v91, %v249
    %v258 = vsub.f32 %v92, %v254
    %v259 = vmul.f32 %v257, %v257
    %v260 = vmul.f32 %v258, %v258
    %v261 = vadd.f32 %v259, 1e-06
    %v262 = vadd.f32 %v260, 1e-06
    %v263 = vrsqrt.pop %v261
    %v264 = vmul.f32 %v261, %v263
    %vm265 = vcmp.eq.f32.partialorder %v261, inf
    %v266 = vsel %vm265, %v261, %v264
    %vm267 = vcmp.eq.f32.partialorder %v261, 0.0
    %v268 = vand.u32 %v261, 2147483648
    %v269 = vsel %vm267, %v268, %v266
    %v270 = vrsqrt.pop %v262
    %v271 = vmul.f32 %v262, %v270
    %vm272 = vcmp.eq.f32.partialorder %v262, inf
    %v273 = vsel %vm272, %v262, %v271
    %vm274 = vcmp.eq.f32.partialorder %v262, 0.0
    %v275 = vand.u32 %v262, 2147483648
    %v276 = vsel %vm274, %v275, %v273
    %v277 = vsel %vm93, %v269, 0.0
    %v278 = vsel %vm93, %v276, 0.0
    %v279 = vadd.f32 %v277, %v278
    %280 = vadd.xlane.f32.xlu0 %v279
    %v281 = vpop.xlane.xlu0 %280
    %v282 = vrot.slane %v281, 4
    %v283 = vadd.f32 %v281, %v282
    %v284 = vrot.slane %v283, 2
    %v285 = vadd.f32 %v283, %v284
    %v286 = vrot.slane %v285, 1
    %v287 = vadd.f32 %v285, %v286
    %s288 = vtos %v287
    %s289 = sadd.f32 %s288, 0.0
    %v290 = vstv %s289
    %291 = vst [vmem:[#allocation10] sm:$0x1] %v290
    // Predicated region
    $region34: #{tpu_custom_call.1} parent=1 // pred_check
      _
    $region35: #{tpu_custom_call.1} parent=1 // pred_check_branch
      %293 = sbr.rel (0) target = $region37
    $region36: #{tpu_custom_call.1} parent=1 // pred_region
      %s295 = ssub.s32 16, 16
      %296 = vsyncadd [#allocation4], %s295
      %s298 = sshll.u32 [#allocation10], 4
      %s299 = int_to_ptr.vmem [resolvable:$true] %s298
      %301 = dma.vmem_to_hbm [thread:$0]  %s299, 16, %s4, [#allocation4]
    $region37: #{tpu_custom_call.1} parent=1 // pred_fallthru
      _
    // Predicated region
    $region38: #{tpu_custom_call.1} parent=1 // pred_check
      _
    $region39: #{tpu_custom_call.1} parent=1 // pred_check_branch
      %303 = sbr.rel (0) target = $region41
    $region40: #{tpu_custom_call.1} parent=1 // pred_region
      %304 = dma.done [#allocation4], 16
    $region41: #{tpu_custom_call.1} parent=1 // pred_fallthru
      _
    %305 = vsyncpa [#allocation3], 1
    %306 = vsyncpa [#allocation6], 1
    %307 = vsyncpa [#allocation9], 1
    %308 = vsyncpa [#allocation4], 1

</llo_original>
